<compile_context>
chip_gen: v5e
topology: v5e:2x2
jax: 0.10.0
libtpu: 0.0.40
codegen_flags: <defaults>
</compile_context>

<pallas_src>
import functools

import jax
import jax.numpy as jnp
from jax import lax
from jax.experimental import pallas as pl
from jax.experimental.pallas import tpu as pltpu

NUM_COLOR_GROUPS = 4
EMBED_DIM = 16
EPS = 1e-5          # InstanceNorm1d default eps
LANE = 128          # TPU lane width
SUBLANE = 8         # TPU sublane width


def _round_up(x, m):
    return ((x + m - 1) // m) * m


def _instance_norm_relu(z):
    # PyTorch InstanceNorm1d on a 2D (B, C) input == per-row normalization over the
    # feature dim, biased variance, eps=1e-5, no affine params (module defaults).
    # var = E[z^2] - mean^2 lets the two cross-lane (XLU) reductions issue
    # independently; clamped at 0 so f32 cancellation cannot go negative.
    mean = jnp.mean(z, axis=-1, keepdims=True)
    var = jnp.maximum(jnp.mean(z * z, axis=-1, keepdims=True) - mean * mean, 0.0)
    return jnp.maximum((z - mean) * lax.rsqrt(var + EPS), 0.0)


def _generator_kernel(num_hidden, x_ref, oh_ref, *refs):
    # refs = [w1x, emb_proj, b1, w2, b2, ..., wN, bN, w_out, b_out, out_ref]
    out_ref = refs[-1]
    p_refs = refs[:-1]

    # ---- layer 1: fused embedding lookup (one-hot matmul) + noise matmul ----
    w1x, embp, b1 = p_refs[0], p_refs[1], p_refs[2]
    z = (jnp.dot(x_ref[...], w1x[...], preferred_element_type=jnp.float32)
         + jnp.dot(oh_ref[...], embp[...], preferred_element_type=jnp.float32)
         + b1[...])
    # TODO(synk): Dropout1d(0.1) is eval-mode identity here (no train-time channel drop).
    h = _instance_norm_relu(z).astype(jnp.bfloat16)

    p = 3
    for _ in range(num_hidden - 1):
        w, b = p_refs[p], p_refs[p + 1]
        p += 2
        z = jnp.dot(h, w[...], preferred_element_type=jnp.float32) + b[...]
        h = _instance_norm_relu(z).astype(jnp.bfloat16)

    wo, bo = p_refs[p], p_refs[p + 1]
    out = jnp.tanh(jnp.dot(h, wo[...], preferred_element_type=jnp.float32) + bo[...])
    out_ref[...] = out.astype(out_ref.dtype)


def init_generator_params(key, noise_size, start_hidden_size,
                          before_hidden_layers_count, output_size_floats):
    """Deterministic synthetic init matching the module's parameter shapes (f32 master)."""
    sizes = [noise_size + EMBED_DIM] + [
        start_hidden_size * 2 ** n for n in range(before_hidden_layers_count + 1)
    ]
    n_layers = len(sizes) - 1
    keys = jax.random.split(key, 2 * n_layers + 3)

    params = {"emb": jax.random.normal(keys[0], (NUM_COLOR_GROUPS, EMBED_DIM),
                                       jnp.float32)}
    ws, bs = [], []
    ki = 1
    for n in range(1, len(sizes)):
        fan_in = sizes[n - 1]
        bound = 1.0 / (fan_in ** 0.5)  # PyTorch Linear default init range
        ws.append(jax.random.uniform(keys[ki], (sizes[n - 1], sizes[n]),
                                     jnp.float32, -bound, bound)); ki += 1
        bs.append(jax.random.uniform(keys[ki], (1, sizes[n]),
                                     jnp.float32, -bound, bound)); ki += 1
    params["ws"], params["bs"] = ws, bs

    fan_in = sizes[-1]
    bound = 1.0 / (fan_in ** 0.5)
    params["wo"] = jax.random.uniform(keys[ki], (sizes[-1], output_size_floats),
                                      jnp.float32, -bound, bound)
    params["bo"] = jax.random.uniform(keys[ki + 1], (1, output_size_floats),
                                      jnp.float32, -bound, bound)
    return params


def generator_forward(params, x, labels, *, block_b=512):
    """x: (B, noise_size) f32, labels: (B, 3) f32 (column 2 is the color group)."""
    batch, noise = x.shape
    ws, bs = params["ws"], params["bs"]
    num_hidden = len(ws)
    out_dim = params["wo"].shape[1]

    # --- fused-embedding prep (no (B, noise+16) concat materialized in HBM) ---
    idx = labels[:, 2].astype(jnp.int32)
    # Out-of-range indices give an all-zero one-hot (PyTorch Embedding would raise).
    onehot = (idx[:, None] == jnp.arange(NUM_COLOR_GROUPS, dtype=jnp.int32)[None, :]
              ).astype(jnp.bfloat16)                                    # (B, 4)
    w1 = ws[0]
    w1x = w1[:noise, :].astype(jnp.bfloat16)                            # (noise, H1)
    emb_proj = (params["emb"] @ w1[noise:, :]).astype(jnp.bfloat16)     # (4, H1)
    x_bf = x.astype(jnp.bfloat16)

    # --- batch tiling: big tiles amortize per-grid-step overhead, keep >= 2 steps
    #     (when batch is big enough) so the parallel axis shards across v7x's 2 TCs ---
    if batch <= SUBLANE:
        tile_b = SUBLANE
    else:
        tile_b = min(block_b, _round_up(_round_up(batch, SUBLANE) // 2, SUBLANE))
    padded_b = _round_up(batch, tile_b)
    if padded_b != batch:
        # Pad rows see zeros -> layer-1 z = b1 -> finite through the norm; sliced off.
        x_bf = jnp.pad(x_bf, ((0, padded_b - batch), (0, 0)))
        onehot = jnp.pad(onehot, ((0, padded_b - batch), (0, 0)))

    # --- lane-dense output head: zero-pad the narrow head to full 128 lanes ---
    out_pad = _round_up(out_dim, LANE)
    wo = jnp.pad(params["wo"], ((0, 0), (0, out_pad - out_dim))).astype(jnp.bfloat16)
    bo = jnp.pad(params["bo"], ((0, 0), (0, out_pad - out_dim)))

    const_map = lambda i: (0, 0)               # weights stay VMEM-resident across tiles
    # TODO(synk): for scaled-up doubling-width configs, add pipeline_mode=pl.Buffered(1)
    # to these constant-index weight specs so v7x (64 MiB VMEM) does not double-buffer
    # blocks that never change; at the current sizes it buys nothing.
    flat_inputs = [x_bf, onehot, w1x, emb_proj, bs[0]]
    in_specs = [
        pl.BlockSpec((tile_b, noise), lambda i: (i, 0)),
        pl.BlockSpec((tile_b, NUM_COLOR_GROUPS), lambda i: (i, 0)),
        pl.BlockSpec(w1x.shape, const_map),
        pl.BlockSpec(emb_proj.shape, const_map),
        pl.BlockSpec(bs[0].shape, const_map),
    ]
    for w, b in zip(ws[1:], bs[1:]):
        flat_inputs += [w.astype(jnp.bfloat16), b]
        in_specs += [pl.BlockSpec(w.shape, const_map), pl.BlockSpec(b.shape, const_map)]
    flat_inputs += [wo, bo]
    in_specs += [pl.BlockSpec(wo.shape, const_map), pl.BlockSpec(bo.shape, const_map)]

    # --- VMEM budget from actual tile/weight sizes (32 MiB floor, fail loudly) ---
    resident = sum(a.size * a.dtype.itemsize for a in flat_inputs[2:])   # weights/biases
    streamed = tile_b * (noise + NUM_COLOR_GROUPS) * 2 + tile_b * out_pad * 2
    act_scratch = tile_b * max(w.shape[1] for w in ws) * 4 * 6           # f32 temporaries
    vmem_limit = max(32 * 1024 * 1024,
                     2 * (resident + streamed) + act_scratch + (4 << 20))

    kernel = functools.partial(_generator_kernel, num_hidden)
    out = pl.pallas_call(
        kernel,
        out_shape=jax.ShapeDtypeStruct((padded_b, out_pad), jnp.bfloat16),
        grid_spec=pltpu.PrefetchScalarGridSpec(
            num_scalar_prefetch=0,
            grid=(padded_b // tile_b,),
            in_specs=in_specs,
            out_specs=pl.BlockSpec((tile_b, out_pad), lambda i: (i, 0)),
        ),
        compiler_params=pltpu.CompilerParams(
            dimension_semantics=("parallel",),
            vmem_limit_bytes=int(vmem_limit),
        ),
    )(*flat_inputs)
    return out[:batch, :out_dim]


def generator_reference(params, x, labels):
    """Pure-JAX f32 reference of the same forward pass (for a correctness check)."""
    idx = labels[:, 2].astype(jnp.int32)
    emb = params["emb"][idx]
    h = jnp.concatenate([x, emb], axis=1)
    for w, b in zip(params["ws"], params["bs"]):
        h = h @ w + b
        mean = h.mean(-1, keepdims=True)
        var = ((h - mean) ** 2).mean(-1, keepdims=True)
        h = jnp.maximum((h - mean) * lax.rsqrt(var + EPS), 0.0)
    return jnp.tanh(h @ params["wo"] + params["bo"])


if __name__ == "__main__":
    key = jax.random.PRNGKey(0)
    kp, kx, kl = jax.random.split(key, 3)

    # Module hyperparameters (small, consistent with the module's constructor).
    noise_size = 32
    start_hidden_size = 32
    before_hidden_layers_count = 2      # hidden widths: 32, 64, 128
    output_size_floats = 24
    batch = 2

    params = init_generator_params(kp, noise_size, start_hidden_size,
                                   before_hidden_layers_count, output_size_floats)

    x = jax.random.normal(kx, (batch, noise_size), jnp.float32)
    color_group = jax.random.randint(kl, (batch,), 0, NUM_COLOR_GROUPS)
    # labels = [0, 0, color_group] per row, as float32 (matches LabelsLayersData).
    labels = jnp.stack([jnp.zeros((batch,)), jnp.zeros((batch,)),
                        color_group.astype(jnp.float32)], axis=1)

    out = generator_forward(params, x, labels)
    jax.block_until_ready(out)

    ref = generator_reference(params, x, labels)
    assert out.shape == (batch, output_size_floats)
    # bf16 matmul inputs + bf16 output vs. the f32 reference -> loose-but-meaningful
    # tolerance (outputs are tanh-bounded in [-1, 1]).
    assert jnp.allclose(out.astype(jnp.float32), ref, atol=5e-2, rtol=5e-2)

    print("KERNEL_OK")
</pallas_src>

<mosaic_0001>
module attributes {stable_mosaic.version = 11 : i64} {
  func.func @_generator_kernel(%arg0: i32, %arg1: memref<8x32xbf16, #tpu.memory_space<vmem>>, %arg2: memref<8x4xbf16, #tpu.memory_space<vmem>>, %arg3: memref<32x32xbf16, #tpu.memory_space<vmem>>, %arg4: memref<4x32xbf16, #tpu.memory_space<vmem>>, %arg5: memref<1x32xf32, #tpu.memory_space<vmem>>, %arg6: memref<32x64xbf16, #tpu.memory_space<vmem>>, %arg7: memref<1x64xf32, #tpu.memory_space<vmem>>, %arg8: memref<64x128xbf16, #tpu.memory_space<vmem>>, %arg9: memref<1x128xf32, #tpu.memory_space<vmem>>, %arg10: memref<128x128xbf16, #tpu.memory_space<vmem>>, %arg11: memref<1x128xf32, #tpu.memory_space<vmem>>, %arg12: memref<8x128xbf16, #tpu.memory_space<vmem>>) attributes {dimension_semantics = [#tpu.dimension_semantics<parallel>], iteration_bounds = array<i64: 1>, scalar_prefetch = 0 : i64, scratch_operands = 0 : i64, tpu.core_type = #tpu.core_type<tc>, window_params = [{transform_indices = @transform_0, window_bounds = array<i64: 8, 32>}, {transform_indices = @transform_1, window_bounds = array<i64: 8, 4>}, {pipeline_mode = #tpu.pipeline_mode<synchronous>, transform_indices = @transform_2, window_bounds = array<i64: 32, 32>}, {pipeline_mode = #tpu.pipeline_mode<synchronous>, transform_indices = @transform_3, window_bounds = array<i64: 4, 32>}, {pipeline_mode = #tpu.pipeline_mode<synchronous>, transform_indices = @transform_4, window_bounds = array<i64: 1, 32>}, {pipeline_mode = #tpu.pipeline_mode<synchronous>, transform_indices = @transform_5, window_bounds = array<i64: 32, 64>}, {pipeline_mode = #tpu.pipeline_mode<synchronous>, transform_indices = @transform_6, window_bounds = array<i64: 1, 64>}, {pipeline_mode = #tpu.pipeline_mode<synchronous>, transform_indices = @transform_7, window_bounds = array<i64: 64, 128>}, {pipeline_mode = #tpu.pipeline_mode<synchronous>, transform_indices = @transform_8, window_bounds = array<i64: 1, 128>}, {pipeline_mode = #tpu.pipeline_mode<synchronous>, transform_indices = @transform_9, window_bounds = array<i64: 128, 128>}, {pipeline_mode = #tpu.pipeline_mode<synchronous>, transform_indices = @transform_10, window_bounds = array<i64: 1, 128>}, {transform_indices = @transform_11, window_bounds = array<i64: 8, 128>}]} {
    %c0 = arith.constant 0 : index
    %c0_0 = arith.constant 0 : index
    %0 = vector.load %arg1[%c0, %c0_0] : memref<8x32xbf16, #tpu.memory_space<vmem>>, vector<8x32xbf16>
    %c0_1 = arith.constant 0 : index
    %c0_2 = arith.constant 0 : index
    %1 = vector.load %arg3[%c0_1, %c0_2] : memref<32x32xbf16, #tpu.memory_space<vmem>>, vector<32x32xbf16>
    %cst = arith.constant dense<0.000000e+00> : vector<8x32xf32>
    %2 = tpu.matmul %0, %1, %cst {dimension_numbers = #tpu.dot_dimension_numbers<[1], [0], [0], [1], [0, 0, 1, 1], [], []>} : vector<8x32xbf16>, vector<32x32xbf16>, vector<8x32xf32> -> vector<8x32xf32>
    %c0_3 = arith.constant 0 : index
    %c0_4 = arith.constant 0 : index
    %3 = vector.load %arg2[%c0_3, %c0_4] : memref<8x4xbf16, #tpu.memory_space<vmem>>, vector<8x4xbf16>
    %c0_5 = arith.constant 0 : index
    %c0_6 = arith.constant 0 : index
    %4 = vector.load %arg4[%c0_5, %c0_6] : memref<4x32xbf16, #tpu.memory_space<vmem>>, vector<4x32xbf16>
    %cst_7 = arith.constant dense<0.000000e+00> : vector<8x32xf32>
    %5 = tpu.matmul %3, %4, %cst_7 {dimension_numbers = #tpu.dot_dimension_numbers<[1], [0], [0], [1], [0, 0, 1, 1], [], []>} : vector<8x4xbf16>, vector<4x32xbf16>, vector<8x32xf32> -> vector<8x32xf32>
    %6 = arith.addf %2, %5 : vector<8x32xf32>
    %c0_8 = arith.constant 0 : index
    %c0_9 = arith.constant 0 : index
    %7 = vector.load %arg5[%c0_8, %c0_9] : memref<1x32xf32, #tpu.memory_space<vmem>>, vector<1x32xf32>
    %8 = vector.broadcast %7 : vector<1x32xf32> to vector<8x32xf32>
    %9 = arith.addf %6, %8 : vector<8x32xf32>
    %cst_10 = arith.constant dense<0.000000e+00> : vector<8xf32>
    %10 = vector.multi_reduction <add>, %9, %cst_10 [1] : vector<8x32xf32> to vector<8xf32>
    %11 = vector.shape_cast %10 : vector<8xf32> to vector<8x1xf32>
    %cst_11 = arith.constant 3.200000e+01 : f32
    %12 = vector.broadcast %cst_11 : f32 to vector<8x1xf32>
    %13 = arith.divf %11, %12 : vector<8x1xf32>
    %14 = arith.mulf %9, %9 : vector<8x32xf32>
    %cst_12 = arith.constant dense<0.000000e+00> : vector<8xf32>
    %15 = vector.multi_reduction <add>, %14, %cst_12 [1] : vector<8x32xf32> to vector<8xf32>
    %16 = vector.shape_cast %15 : vector<8xf32> to vector<8x1xf32>
    %cst_13 = arith.constant 3.200000e+01 : f32
    %17 = vector.broadcast %cst_13 : f32 to vector<8x1xf32>
    %18 = arith.divf %16, %17 : vector<8x1xf32>
    %19 = arith.mulf %13, %13 : vector<8x1xf32>
    %20 = arith.subf %18, %19 : vector<8x1xf32>
    %cst_14 = arith.constant 0.000000e+00 : f32
    %21 = vector.broadcast %cst_14 : f32 to vector<8x1xf32>
    %22 = arith.maximumf %20, %21 : vector<8x1xf32>
    %23 = vector.broadcast %13 : vector<8x1xf32> to vector<8x32xf32>
    %24 = arith.subf %9, %23 : vector<8x32xf32>
    %cst_15 = arith.constant 9.99999974E-6 : f32
    %25 = vector.broadcast %cst_15 : f32 to vector<8x1xf32>
    %26 = arith.addf %22, %25 : vector<8x1xf32>
    %27 = math.rsqrt %26 : vector<8x1xf32>
    %28 = vector.broadcast %27 : vector<8x1xf32> to vector<8x32xf32>
    %29 = arith.mulf %24, %28 : vector<8x32xf32>
    %cst_16 = arith.constant 0.000000e+00 : f32
    %30 = vector.broadcast %cst_16 : f32 to vector<8x32xf32>
    %31 = arith.maximumf %29, %30 : vector<8x32xf32>
    %32 = arith.truncf %31 : vector<8x32xf32> to vector<8x32xbf16>
    %c0_17 = arith.constant 0 : index
    %c0_18 = arith.constant 0 : index
    %33 = vector.load %arg6[%c0_17, %c0_18] : memref<32x64xbf16, #tpu.memory_space<vmem>>, vector<32x64xbf16>
    %cst_19 = arith.constant dense<0.000000e+00> : vector<8x64xf32>
    %34 = tpu.matmul %32, %33, %cst_19 {dimension_numbers = #tpu.dot_dimension_numbers<[1], [0], [0], [1], [0, 0, 1, 1], [], []>} : vector<8x32xbf16>, vector<32x64xbf16>, vector<8x64xf32> -> vector<8x64xf32>
    %c0_20 = arith.constant 0 : index
    %c0_21 = arith.constant 0 : index
    %35 = vector.load %arg7[%c0_20, %c0_21] : memref<1x64xf32, #tpu.memory_space<vmem>>, vector<1x64xf32>
    %36 = vector.broadcast %35 : vector<1x64xf32> to vector<8x64xf32>
    %37 = arith.addf %34, %36 : vector<8x64xf32>
    %cst_22 = arith.constant dense<0.000000e+00> : vector<8xf32>
    %38 = vector.multi_reduction <add>, %37, %cst_22 [1] : vector<8x64xf32> to vector<8xf32>
    %39 = vector.shape_cast %38 : vector<8xf32> to vector<8x1xf32>
    %cst_23 = arith.constant 6.400000e+01 : f32
    %40 = vector.broadcast %cst_23 : f32 to vector<8x1xf32>
    %41 = arith.divf %39, %40 : vector<8x1xf32>
    %42 = arith.mulf %37, %37 : vector<8x64xf32>
    %cst_24 = arith.constant dense<0.000000e+00> : vector<8xf32>
    %43 = vector.multi_reduction <add>, %42, %cst_24 [1] : vector<8x64xf32> to vector<8xf32>
    %44 = vector.shape_cast %43 : vector<8xf32> to vector<8x1xf32>
    %cst_25 = arith.constant 6.400000e+01 : f32
    %45 = vector.broadcast %cst_25 : f32 to vector<8x1xf32>
    %46 = arith.divf %44, %45 : vector<8x1xf32>
    %47 = arith.mulf %41, %41 : vector<8x1xf32>
    %48 = arith.subf %46, %47 : vector<8x1xf32>
    %cst_26 = arith.constant 0.000000e+00 : f32
    %49 = vector.broadcast %cst_26 : f32 to vector<8x1xf32>
    %50 = arith.maximumf %48, %49 : vector<8x1xf32>
    %51 = vector.broadcast %41 : vector<8x1xf32> to vector<8x64xf32>
    %52 = arith.subf %37, %51 : vector<8x64xf32>
    %cst_27 = arith.constant 9.99999974E-6 : f32
    %53 = vector.broadcast %cst_27 : f32 to vector<8x1xf32>
    %54 = arith.addf %50, %53 : vector<8x1xf32>
    %55 = math.rsqrt %54 : vector<8x1xf32>
    %56 = vector.broadcast %55 : vector<8x1xf32> to vector<8x64xf32>
    %57 = arith.mulf %52, %56 : vector<8x64xf32>
    %cst_28 = arith.constant 0.000000e+00 : f32
    %58 = vector.broadcast %cst_28 : f32 to vector<8x64xf32>
    %59 = arith.maximumf %57, %58 : vector<8x64xf32>
    %60 = arith.truncf %59 : vector<8x64xf32> to vector<8x64xbf16>
    %c0_29 = arith.constant 0 : index
    %c0_30 = arith.constant 0 : index
    %61 = vector.load %arg8[%c0_29, %c0_30] : memref<64x128xbf16, #tpu.memory_space<vmem>>, vector<64x128xbf16>
    %cst_31 = arith.constant dense<0.000000e+00> : vector<8x128xf32>
    %62 = tpu.matmul %60, %61, %cst_31 {dimension_numbers = #tpu.dot_dimension_numbers<[1], [0], [0], [1], [0, 0, 1, 1], [], []>} : vector<8x64xbf16>, vector<64x128xbf16>, vector<8x128xf32> -> vector<8x128xf32>
    %c0_32 = arith.constant 0 : index
    %c0_33 = arith.constant 0 : index
    %63 = vector.load %arg9[%c0_32, %c0_33] : memref<1x128xf32, #tpu.memory_space<vmem>>, vector<1x128xf32>
    %64 = vector.broadcast %63 : vector<1x128xf32> to vector<8x128xf32>
    %65 = arith.addf %62, %64 : vector<8x128xf32>
    %cst_34 = arith.constant dense<0.000000e+00> : vector<8xf32>
    %66 = vector.multi_reduction <add>, %65, %cst_34 [1] : vector<8x128xf32> to vector<8xf32>
    %67 = vector.shape_cast %66 : vector<8xf32> to vector<8x1xf32>
    %cst_35 = arith.constant 1.280000e+02 : f32
    %68 = vector.broadcast %cst_35 : f32 to vector<8x1xf32>
    %69 = arith.divf %67, %68 : vector<8x1xf32>
    %70 = arith.mulf %65, %65 : vector<8x128xf32>
    %cst_36 = arith.constant dense<0.000000e+00> : vector<8xf32>
    %71 = vector.multi_reduction <add>, %70, %cst_36 [1] : vector<8x128xf32> to vector<8xf32>
    %72 = vector.shape_cast %71 : vector<8xf32> to vector<8x1xf32>
    %cst_37 = arith.constant 1.280000e+02 : f32
    %73 = vector.broadcast %cst_37 : f32 to vector<8x1xf32>
    %74 = arith.divf %72, %73 : vector<8x1xf32>
    %75 = arith.mulf %69, %69 : vector<8x1xf32>
    %76 = arith.subf %74, %75 : vector<8x1xf32>
    %cst_38 = arith.constant 0.000000e+00 : f32
    %77 = vector.broadcast %cst_38 : f32 to vector<8x1xf32>
    %78 = arith.maximumf %76, %77 : vector<8x1xf32>
    %79 = vector.broadcast %69 : vector<8x1xf32> to vector<8x128xf32>
    %80 = arith.subf %65, %79 : vector<8x128xf32>
    %cst_39 = arith.constant 9.99999974E-6 : f32
    %81 = vector.broadcast %cst_39 : f32 to vector<8x1xf32>
    %82 = arith.addf %78, %81 : vector<8x1xf32>
    %83 = math.rsqrt %82 : vector<8x1xf32>
    %84 = vector.broadcast %83 : vector<8x1xf32> to vector<8x128xf32>
    %85 = arith.mulf %80, %84 : vector<8x128xf32>
    %cst_40 = arith.constant 0.000000e+00 : f32
    %86 = vector.broadcast %cst_40 : f32 to vector<8x128xf32>
    %87 = arith.maximumf %85, %86 : vector<8x128xf32>
    %88 = arith.truncf %87 : vector<8x128xf32> to vector<8x128xbf16>
    %c0_41 = arith.constant 0 : index
    %c0_42 = arith.constant 0 : index
    %89 = vector.load %arg10[%c0_41, %c0_42] : memref<128x128xbf16, #tpu.memory_space<vmem>>, vector<128x128xbf16>
    %cst_43 = arith.constant dense<0.000000e+00> : vector<8x128xf32>
    %90 = tpu.matmul %88, %89, %cst_43 {dimension_numbers = #tpu.dot_dimension_numbers<[1], [0], [0], [1], [0, 0, 1, 1], [], []>} : vector<8x128xbf16>, vector<128x128xbf16>, vector<8x128xf32> -> vector<8x128xf32>
    %c0_44 = arith.constant 0 : index
    %c0_45 = arith.constant 0 : index
    %91 = vector.load %arg11[%c0_44, %c0_45] : memref<1x128xf32, #tpu.memory_space<vmem>>, vector<1x128xf32>
    %92 = vector.broadcast %91 : vector<1x128xf32> to vector<8x128xf32>
    %93 = arith.addf %90, %92 : vector<8x128xf32>
    %94 = math.tanh %93 : vector<8x128xf32>
    %95 = arith.truncf %94 : vector<8x128xf32> to vector<8x128xbf16>
    %c0_46 = arith.constant 0 : index
    %c0_47 = arith.constant 0 : index
    %96 = vector.load %arg12[%c0_46, %c0_47] : memref<8x128xbf16, #tpu.memory_space<vmem>>, vector<8x128xbf16>
    tpu.vector_store %arg12[%c0_46, %c0_47], %95 {strides = array<i32>} : memref<8x128xbf16, #tpu.memory_space<vmem>>, vector<8x128xbf16>,
    return
  }
  func.func @transform_0(%arg0: i32) -> (i32, i32) {
    %c0_i32 = arith.constant 0 : i32
    %c0_i32_0 = arith.constant 0 : i32
    return %arg0, %c0_i32 : i32, i32
  }
  func.func @transform_1(%arg0: i32) -> (i32, i32) {
    %c0_i32 = arith.constant 0 : i32
    %c0_i32_0 = arith.constant 0 : i32
    return %arg0, %c0_i32 : i32, i32
  }
  func.func @transform_2(%arg0: i32) -> (i32, i32) {
    %c0_i32 = arith.constant 0 : i32
    %c0_i32_0 = arith.constant 0 : i32
    %c0_i32_1 = arith.constant 0 : i32
    return %c0_i32, %c0_i32_0 : i32, i32
  }
  func.func @transform_3(%arg0: i32) -> (i32, i32) {
    %c0_i32 = arith.constant 0 : i32
    %c0_i32_0 = arith.constant 0 : i32
    %c0_i32_1 = arith.constant 0 : i32
    return %c0_i32, %c0_i32_0 : i32, i32
  }
  func.func @transform_4(%arg0: i32) -> (i32, i32) {
    %c0_i32 = arith.constant 0 : i32
    %c0_i32_0 = arith.constant 0 : i32
    %c0_i32_1 = arith.constant 0 : i32
    return %c0_i32, %c0_i32_0 : i32, i32
  }
  func.func @transform_5(%arg0: i32) -> (i32, i32) {
    %c0_i32 = arith.constant 0 : i32
    %c0_i32_0 = arith.constant 0 : i32
    %c0_i32_1 = arith.constant 0 : i32
    return %c0_i32, %c0_i32_0 : i32, i32
  }
  func.func @transform_6(%arg0: i32) -> (i32, i32) {
    %c0_i32 = arith.constant 0 : i32
    %c0_i32_0 = arith.constant 0 : i32
    %c0_i32_1 = arith.constant 0 : i32
    return %c0_i32, %c0_i32_0 : i32, i32
  }
  func.func @transform_7(%arg0: i32) -> (i32, i32) {
    %c0_i32 = arith.constant 0 : i32
    %c0_i32_0 = arith.constant 0 : i32
    %c0_i32_1 = arith.constant 0 : i32
    return %c0_i32, %c0_i32_0 : i32, i32
  }
  func.func @transform_8(%arg0: i32) -> (i32, i32) {
    %c0_i32 = arith.constant 0 : i32
    %c0_i32_0 = arith.constant 0 : i32
    %c0_i32_1 = arith.constant 0 : i32
    return %c0_i32, %c0_i32_0 : i32, i32
  }
  func.func @transform_9(%arg0: i32) -> (i32, i32) {
    %c0_i32 = arith.constant 0 : i32
    %c0_i32_0 = arith.constant 0 : i32
    %c0_i32_1 = arith.constant 0 : i32
    return %c0_i32, %c0_i32_0 : i32, i32
  }
  func.func @transform_10(%arg0: i32) -> (i32, i32) {
    %c0_i32 = arith.constant 0 : i32
    %c0_i32_0 = arith.constant 0 : i32
    %c0_i32_1 = arith.constant 0 : i32
    return %c0_i32, %c0_i32_0 : i32, i32
  }
  func.func @transform_11(%arg0: i32) -> (i32, i32) {
    %c0_i32 = arith.constant 0 : i32
    %c0_i32_0 = arith.constant 0 : i32
    return %arg0, %c0_i32 : i32, i32
  }
}

</mosaic_0001>

<llo_original>
// kernel: tpu_custom_call.1
$region0: #{tpu_custom_call.1}
  #allocation0 [shape = 'u32[]', space=smem, size = 0x4, offset = 0x4, fixed_abs, tag = 'smem constant byte address 0x4 - core index']
  #allocation1 [shape = 'u32[72,128]{1,0:T(1,128)}', space=vmem, size = 0x9000, scoped, tag = 'internal scratch']
  %s0 = inlined_call_operand.vmem [shape: bf16[8,32], index: 0, kind: input, shape index: {}]
  %s1 = inlined_call_operand.vmem [shape: bf16[8,4], index: 1, kind: input, shape index: {}]
  %s2 = inlined_call_operand.hbm [shape: bf16[32,32], index: 2, kind: input, shape index: {}]
  %s3 = inlined_call_operand.vmem [shape: bf16[4,32], index: 3, kind: input, shape index: {}]
  %s4 = inlined_call_operand.vmem [shape: f32[1,32], index: 4, kind: input, shape index: {}]
  %s5 = inlined_call_operand.hbm [shape: bf16[32,64], index: 5, kind: input, shape index: {}]
  %s6 = inlined_call_operand.vmem [shape: f32[1,64], index: 6, kind: input, shape index: {}]
  %s7 = inlined_call_operand.hbm [shape: bf16[64,128], index: 7, kind: input, shape index: {}]
  %s8 = inlined_call_operand.vmem [shape: f32[1,128], index: 8, kind: input, shape index: {}]
  %s9 = inlined_call_operand.hbm [shape: bf16[128,128], index: 9, kind: input, shape index: {}]
  %s10 = inlined_call_operand.vmem [shape: f32[1,128], index: 10, kind: input, shape index: {}]
  %s11 = inlined_call_operand.hbm [shape: bf16[8,128], index: 11, kind: output, shape index: {}]
  %s12 = sld [smem:[#allocation0]]
  $region70: #{tpu_custom_call.1} parent=0
    _
  %s14 = ssub.s32 1, %s12
  %s15 = scalar_select 0, %s14, %s12
  $region1: #{tpu_custom_call.1} parent=0
    #allocation2 [shape = 'u8[8192]{0}', space=vmem, size = 0x2000, scoped, tag = 'input window, operand 2, single buffered']
    #allocation3 [shape = 's32[1]{0}', space=sflag, size = 0x4, scoped, tag = 'scoped memory for tpu_custom_call.1']
    #allocation4 [shape = 's32[1]{0}', space=sflag, size = 0x4, scoped, tag = 'scoped memory for tpu_custom_call.1']
    #allocation5 [shape = 'u8[8192]{0}', space=vmem, size = 0x2000, scoped, tag = 'input window, operand 5, single buffered']
    #allocation6 [shape = 's32[1]{0}', space=sflag, size = 0x4, scoped, tag = 'scoped memory for tpu_custom_call.1']
    #allocation7 [shape = 'u8[16384]{0}', space=vmem, size = 0x4000, scoped, tag = 'input window, operand 7, single buffered']
    #allocation8 [shape = 'u8[32768]{0}', space=vmem, size = 0x8000, scoped, tag = 'input window, operand 9, single buffered']
    #allocation9 [shape = 's32[1]{0}', space=sflag, size = 0x4, scoped, tag = 'scoped memory for tpu_custom_call.1']
    #allocation10 [shape = 'u8[2048]{0}', space=vmem, size = 0x800, scoped, tag = 'output window, operand 0, single buffered']
    %16 = vsyncpa [#allocation3], 0
    %17 = vsyncpa [#allocation6], 0
    %18 = vsyncpa [#allocation9], 0
    %19 = vsyncpa [#allocation4], 0
    // Predicated region
    $region2: #{tpu_custom_call.1} parent=1 // pred_check
      _
    $region3: #{tpu_custom_call.1} parent=1 // pred_check_branch
      %21 = sbr.rel (0) target = $region5
    $region4: #{tpu_custom_call.1} parent=1 // pred_region
      _
    $region5: #{tpu_custom_call.1} parent=1 // pred_fallthru
      _
    // Predicated region
    $region6: #{tpu_custom_call.1} parent=1 // pred_check
      _
    $region7: #{tpu_custom_call.1} parent=1 // pred_check_branch
      %23 = sbr.rel (0) target = $region9
    $region8: #{tpu_custom_call.1} parent=1 // pred_region
      _
    $region9: #{tpu_custom_call.1} parent=1 // pred_fallthru
      _
    // Predicated region
    $region10: #{tpu_custom_call.1} parent=1 // pred_check
      _
    $region11: #{tpu_custom_call.1} parent=1 // pred_check_branch
      %25 = sbr.rel (0) target = $region13
    $region12: #{tpu_custom_call.1} parent=1 // pred_region
      %27 = vsyncadd [#allocation3], 0
      %s28 = sshll.u32 %s2, 4
      %s29 = int_to_ptr.hbm [resolvable:$true] %s28
      %s30 = sshll.u32 [#allocation2], 4
      %s31 = int_to_ptr.vmem [resolvable:$true] %s30
      %36 = dma.hbm_to_vmem [thread:$0]  %s29, 256, %s31, [#allocation3], 64, 64, 4
    $region13: #{tpu_custom_call.1} parent=1 // pred_fallthru
      _
    // Predicated region
    $region14: #{tpu_custom_call.1} parent=1 // pred_check
      _
    $region15: #{tpu_custom_call.1} parent=1 // pred_check_branch
      %38 = sbr.rel (0) target = $region17
    $region16: #{tpu_custom_call.1} parent=1 // pred_region
      _
    $region17: #{tpu_custom_call.1} parent=1 // pred_fallthru
      _
    // Predicated region
    $region18: #{tpu_custom_call.1} parent=1 // pred_check
      _
    $region19: #{tpu_custom_call.1} parent=1 // pred_check_branch
      %40 = sbr.rel (0) target = $region21
    $region20: #{tpu_custom_call.1} parent=1 // pred_region
      _
    $region21: #{tpu_custom_call.1} parent=1 // pred_fallthru
      _
    // Predicated region
    $region22: #{tpu_custom_call.1} parent=1 // pred_check
      _
    $region23: #{tpu_custom_call.1} parent=1 // pred_check_branch
      %42 = sbr.rel (0) target = $region25
    $region24: #{tpu_custom_call.1} parent=1 // pred_region
      %44 = vsyncadd [#allocation6], 0
      %s45 = sshll.u32 %s5, 4
      %s46 = int_to_ptr.hbm [resolvable:$true] %s45
      %s47 = sshll.u32 [#allocation5], 4
      %s48 = int_to_ptr.vmem [resolvable:$true] %s47
      %53 = dma.hbm_to_vmem [thread:$0]  %s46, 256, %s48, [#allocation6], 64, 64, 4
    $region25: #{tpu_custom_call.1} parent=1 // pred_fallthru
      _
    // Predicated region
    $region26: #{tpu_custom_call.1} parent=1 // pred_check
      _
    $region27: #{tpu_custom_call.1} parent=1 // pred_check_branch
      %55 = sbr.rel (0) target = $region29
    $region28: #{tpu_custom_call.1} parent=1 // pred_region
      _
    $region29: #{tpu_custom_call.1} parent=1 // pred_fallthru
      _
    // Predicated region
    $region30: #{tpu_custom_call.1} parent=1 // pred_check
      _
    $region31: #{tpu_custom_call.1} parent=1 // pred_check_branch
      %57 = sbr.rel (0) target = $region33
    $region32: #{tpu_custom_call.1} parent=1 // pred_region
      %59 = vsyncadd [#allocation6], 0
      %s60 = sshll.u32 %s7, 4
      %s61 = int_to_ptr.hbm [resolvable:$true] %s60
      %s62 = sshll.u32 [#allocation7], 4
      %s63 = int_to_ptr.vmem [resolvable:$true] %s62
      %68 = dma.hbm_to_vmem [thread:$0]  %s61, 512, %s63, [#allocation6], 64, 64, 4
    $region33: #{tpu_custom_call.1} parent=1 // pred_fallthru
      _
    // Predicated region
    $region34: #{tpu_custom_call.1} parent=1 // pred_check
      _
    $region35: #{tpu_custom_call.1} parent=1 // pred_check_branch
      %70 = sbr.rel (0) target = $region37
    $region36: #{tpu_custom_call.1} parent=1 // pred_region
      _
    $region37: #{tpu_custom_call.1} parent=1 // pred_fallthru
      _
    // Predicated region
    $region38: #{tpu_custom_call.1} parent=1 // pred_check
      _
    $region39: #{tpu_custom_call.1} parent=1 // pred_check_branch
      %72 = sbr.rel (0) target = $region41
    $region40: #{tpu_custom_call.1} parent=1 // pred_region
      %74 = vsyncadd [#allocation9], 0
      %s75 = sshll.u32 %s9, 4
      %s76 = int_to_ptr.hbm [resolvable:$true] %s75
      %s77 = sshll.u32 [#allocation8], 4
      %s78 = int_to_ptr.vmem [resolvable:$true] %s77
      %83 = dma.hbm_to_vmem [thread:$0]  %s76, 1024, %s78, [#allocation9], 64, 64, 4
    $region41: #{tpu_custom_call.1} parent=1 // pred_fallthru
      _
    // Predicated region
    $region42: #{tpu_custom_call.1} parent=1 // pred_check
      _
    $region43: #{tpu_custom_call.1} parent=1 // pred_check_branch
      %85 = sbr.rel (0) target = $region45
    $region44: #{tpu_custom_call.1} parent=1 // pred_region
      _
    $region45: #{tpu_custom_call.1} parent=1 // pred_fallthru
      _
    // Predicated region
    $region46: #{tpu_custom_call.1} parent=1 // pred_check
      _
    $region47: #{tpu_custom_call.1} parent=1 // pred_check_branch
      %87 = sbr.rel (0) target = $region49
    $region48: #{tpu_custom_call.1} parent=1 // pred_region
      %89 = dma.done [#allocation3], 256
    $region49: #{tpu_custom_call.1} parent=1 // pred_fallthru
      _
    // Predicated region
    $region50: #{tpu_custom_call.1} parent=1 // pred_check
      _
    $region51: #{tpu_custom_call.1} parent=1 // pred_check_branch
      %91 = sbr.rel (0) target = $region53
    $region52: #{tpu_custom_call.1} parent=1 // pred_region
      %93 = dma.done [#allocation6], 256
    $region53: #{tpu_custom_call.1} parent=1 // pred_fallthru
      _
    // Predicated region
    $region54: #{tpu_custom_call.1} parent=1 // pred_check
      _
    $region55: #{tpu_custom_call.1} parent=1 // pred_check_branch
      %95 = sbr.rel (0) target = $region57
    $region56: #{tpu_custom_call.1} parent=1 // pred_region
      %97 = dma.done [#allocation6], 512
    $region57: #{tpu_custom_call.1} parent=1 // pred_fallthru
      _
    // Predicated region
    $region58: #{tpu_custom_call.1} parent=1 // pred_check
      _
    $region59: #{tpu_custom_call.1} parent=1 // pred_check_branch
      %99 = sbr.rel (0) target = $region61
    $region60: #{tpu_custom_call.1} parent=1 // pred_region
      %101 = dma.done [#allocation9], 1024
    $region61: #{tpu_custom_call.1} parent=1 // pred_fallthru
      _
    %v103 = vld [vmem:[%s0] sm:$0xf]
    %v104 = vld [vmem:[#allocation2] sm:$0xf]
    %v105 = vld [vmem:[#allocation2 + $0x4] sm:$0xf]
    %v106 = vld [vmem:[#allocation2 + $0x8] sm:$0xf]
    %v107 = vld [vmem:[#allocation2 + $0xc] sm:$0xf]
    %v108 = vld [vmem:[%s1] sm:$0xf]
    %v109 = vld [vmem:[%s3] sm:$0x3]
    %vm110 = vcmask 31744
    %v112 = vsel %vm110, %v108, 0
    %vm114 = vcmask 1041408
    %v116 = vsel %vm114, %v109, 0
    %118 = vmatpush.bf16.msra.mxu0 0
    %119 = vmatpush.bf16.msra.mxu0 0
    %120 = vmatpush.bf16.msra.mxu0 0
    %121 = vmatpush.bf16.msra.mxu0 0
    %122 = vmatpush.bf16.msra.mxu0 0
    %123 = vmatpush.bf16.msra.mxu0 0
    %124 = vmatpush.bf16.msra.mxu0 0
    %125 = vmatpush.bf16.msra.mxu0 %v116
    %126 = vmatmul.bf16.gmra.mxu0 %v112
    %v127 = vpop.f32.mrf.mxu0
    %v128 = vadd.f32 0.0, %v127
    %v129 = vpop.f32.mrf.mxu0
    %130 = vdwg.mxu0
    %v135 = vunpack.c.l.b16 %v104
    %v136 = vunpack.c.l.b16 %v105
    %v137 = vunpack.c.l.b16 %v106
    %v138 = vunpack.c.l.b16 %v107
    %v139 = vpack.c.b16 %v136, %v135
    %v140 = vpack.c.b16 %v138, %v137
    %vm143 = vcmask 261120
    %v145 = vsel %vm143, %v103, 0
    %147 = vmatpush.bf16.msra.mxu0 0
    %148 = vmatpush.bf16.msra.mxu0 0
    %149 = vmatpush.bf16.msra.mxu0 0
    %150 = vmatpush.bf16.msra.mxu0 0
    %151 = vmatpush.bf16.msra.mxu0 0
    %152 = vmatpush.bf16.msra.mxu0 0
    %153 = vmatpush.bf16.msra.mxu0 %v140
    %154 = vmatpush.bf16.msra.mxu0 %v139
    %155 = vmatmul.bf16.gmra.mxu0 %v145
    %v156 = vpop.f32.mrf.mxu0
    %v157 = vadd.f32 %v128, %v156
    %v158 = vpop.f32.mrf.mxu0
    %159 = vdwg.mxu0
    %v160 = vld [vmem:[%s4] sm:$0x1]
    %v162 = vperm.slane %v160, 0
    %v164 = vadd.f32 %v157, %v162
    %v165 = vsel %vm143, %v164, 0.0
    %166 = vadd.xlane.f32.xlu0 %v165
    %v167 = vpop.xlane.xlu0 %166
    %v168 = vrcp.pop 32.0
    %v169 = vmul.f32 32.0, %v168
    %v170 = vsub.f32 1.0, %v169
    %v171 = vmul.f32 %v168, %v170
    %v172 = vadd.f32 %v168, %v171
    %vm173 = vweird.f32 %v168
    %v174 = vsel %vm173, %v168, %v172
    %v175 = vmul.f32 %v167, %v174
    %v176 = vmul.f32 %v164, %v164
    %v177 = vsel %vm143, %v176, 0.0
    %178 = vadd.xlane.f32.xlu0 %v177
    %v179 = vpop.xlane.xlu0 %178
    %v180 = vmul.f32 %v179, %v174
    %v181 = vmul.f32 %v175, %v175
    %v182 = vsub.f32 %v180, %v181
    %v183 = vmax.f32 %v182, 0.0
    %v184 = vsub.f32 %v164, %v175
    %v185 = vadd.f32 %v183, 1e-05
    %v186 = vrsqrt.pop %v185
    %v187 = vmul.f32 %v186, %v185
    %v188 = vmul.f32 %v187, %v186
    %v189 = vmul.f32 0.5, %v188
    %v190 = vsub.f32 1.5, %v189
    %v191 = vmul.f32 %v186, %v190
    %vm192 = vweird.f32 %v185
    %vm193 = vweird.f32 %v186
    %vm194 = vmor %vm192, %vm193
    %v195 = vsel %vm194, %v186, %v191
    %v196 = vmul.f32 %v184, %v195
    %v197 = vmax.f32 %v196, 0.0
    %v198 = vpack.c.bf16 %v197, %v197
    %v199 = vld [vmem:[#allocation5] sm:$0xf]
    %v200 = vld [vmem:[#allocation5 + $0x4] sm:$0xf]
    %v201 = vld [vmem:[#allocation5 + $0x8] sm:$0xf]
    %v202 = vld [vmem:[#allocation5 + $0xc] sm:$0xf]
    %v203 = vld [vmem:[%s6] sm:$0x1]
    %v205 = vperm.slane %v203, 0
    %v211 = vunpack.c.l.b16 %v199
    %v212 = vunpack.c.l.b16 %v200
    %v213 = vunpack.c.l.b16 %v201
    %v214 = vunpack.c.l.b16 %v202
    %v215 = vpack.c.b16 %v212, %v211
    %v216 = vpack.c.b16 %v214, %v213
    %v220 = vsel %vm143, %v198, 0
    %222 = vmatpush.bf16.msra.mxu0 0
    %223 = vmatpush.bf16.msra.mxu0 0
    %224 = vmatpush.bf16.msra.mxu0 0
    %225 = vmatpush.bf16.msra.mxu0 0
    %226 = vmatpush.bf16.msra.mxu0 0
    %227 = vmatpush.bf16.msra.mxu0 0
    %228 = vmatpush.bf16.msra.mxu0 %v216
    %229 = vmatpush.bf16.msra.mxu0 %v215
    %230 = vmatmul.bf16.gmra.mxu0 %v220
    %v231 = vpop.f32.mrf.mxu0
    %v232 = vadd.f32 %v205, %v231
    %v233 = vpop.f32.mrf.mxu0
    %234 = vdwg.mxu0
    %vm235 = vcmask 523264
    %v236 = vsel %vm235, %v232, 0.0
    %237 = vadd.xlane.f32.xlu0 %v236
    %v238 = vpop.xlane.xlu0 %237
    %v239 = vrcp.pop 64.0
    %v240 = vmul.f32 64.0, %v239
    %v241 = vsub.f32 1.0, %v240
    %v242 = vmul.f32 %v239, %v241
    %v243 = vadd.f32 %v239, %v242
    %vm244 = vweird.f32 %v239
    %v245 = vsel %vm244, %v239, %v243
    %v246 = vmul.f32 %v238, %v245
    %v247 = vmul.f32 %v232, %v232
    %v248 = vsel %vm235, %v247, 0.0
    %249 = vadd.xlane.f32.xlu0 %v248
    %v250 = vpop.xlane.xlu0 %249
    %v251 = vmul.f32 %v250, %v245
    %v252 = vmul.f32 %v246, %v246
    %v253 = vsub.f32 %v251, %v252
    %v254 = vmax.f32 %v253, 0.0
    %v255 = vsub.f32 %v232, %v246
    %v256 = vadd.f32 %v254, 1e-05
    %v257 = vrsqrt.pop %v256
    %v258 = vmul.f32 %v257, %v256
    %v259 = vmul.f32 %v258, %v257
    %v260 = vmul.f32 0.5, %v259
    %v261 = vsub.f32 1.5, %v260
    %v262 = vmul.f32 %v257, %v261
    %vm263 = vweird.f32 %v256
    %vm264 = vweird.f32 %v257
    %vm265 = vmor %vm263, %vm264
    %v266 = vsel %vm265, %v257, %v262
    %v267 = vmul.f32 %v255, %v266
    %v268 = vmax.f32 %v267, 0.0
    %v269 = vpack.c.bf16 %v268, %v268
    %v270 = vld [vmem:[#allocation7] sm:$0xf]
    %v271 = vld [vmem:[#allocation7 + $0x4] sm:$0xf]
    %v272 = vld [vmem:[#allocation7 + $0x8] sm:$0xf]
    %v273 = vld [vmem:[#allocation7 + $0xc] sm:$0xf]
    %v274 = vld [vmem:[#allocation7 + $0x10] sm:$0xf]
    %v275 = vld [vmem:[#allocation7 + $0x14] sm:$0xf]
    %v276 = vld [vmem:[#allocation7 + $0x18] sm:$0xf]
    %v277 = vld [vmem:[#allocation7 + $0x1c] sm:$0xf]
    %v278 = vld [vmem:[%s8] sm:$0x1]
    %v280 = vperm.slane %v278, 0
    %v290 = vunpack.c.l.b16 %v270
    %v291 = vunpack.c.l.b16 %v271
    %v292 = vunpack.c.l.b16 %v272
    %v293 = vunpack.c.l.b16 %v273
    %v294 = vunpack.c.l.b16 %v274
    %v295 = vunpack.c.l.b16 %v275
    %v296 = vunpack.c.l.b16 %v276
    %v297 = vunpack.c.l.b16 %v277
    %v298 = vpack.c.b16 %v291, %v290
    %v299 = vpack.c.b16 %v293, %v292
    %v300 = vpack.c.b16 %v295, %v294
    %v301 = vpack.c.b16 %v297, %v296
    %v307 = vsel %vm235, %v269, 0
    %309 = vmatpush.bf16.msra.mxu0 0
    %310 = vmatpush.bf16.msra.mxu0 0
    %311 = vmatpush.bf16.msra.mxu0 0
    %312 = vmatpush.bf16.msra.mxu0 0
    %313 = vmatpush.bf16.msra.mxu0 %v301
    %314 = vmatpush.bf16.msra.mxu0 %v300
    %315 = vmatpush.bf16.msra.mxu0 %v299
    %316 = vmatpush.bf16.msra.mxu0 %v298
    %317 = vmatmul.bf16.gmra.mxu0 %v307
    %v318 = vpop.f32.mrf.mxu0
    %v319 = vadd.f32 %v280, %v318
    %v320 = vpop.f32.mrf.mxu0
    %321 = vdwg.mxu0
    %322 = vadd.xlane.f32.xlu0 %v319
    %v323 = vpop.xlane.xlu0 %322
    %v324 = vrcp.pop 128.0
    %v325 = vmul.f32 128.0, %v324
    %v326 = vsub.f32 1.0, %v325
    %v327 = vmul.f32 %v324, %v326
    %v328 = vadd.f32 %v324, %v327
    %vm329 = vweird.f32 %v324
    %v330 = vsel %vm329, %v324, %v328
    %v331 = vmul.f32 %v323, %v330
    %v332 = vmul.f32 %v319, %v319
    %333 = vadd.xlane.f32.xlu0 %v332
    %v334 = vpop.xlane.xlu0 %333
    %v335 = vmul.f32 %v334, %v330
    %v336 = vmul.f32 %v331, %v331
    %v337 = vsub.f32 %v335, %v336
    %v338 = vmax.f32 %v337, 0.0
    %v339 = vsub.f32 %v319, %v331
    %v340 = vadd.f32 %v338, 1e-05
    %v341 = vrsqrt.pop %v340
    %v342 = vmul.f32 %v341, %v340
    %v343 = vmul.f32 %v342, %v341
    %v344 = vmul.f32 0.5, %v343
    %v345 = vsub.f32 1.5, %v344
    %v346 = vmul.f32 %v341, %v345
    %vm347 = vweird.f32 %v340
    %vm348 = vweird.f32 %v341
    %vm349 = vmor %vm347, %vm348
    %v350 = vsel %vm349, %v341, %v346
    %v351 = vmul.f32 %v339, %v350
    %v352 = vmax.f32 %v351, 0.0
    %v353 = vpack.c.bf16 %v352, %v352
    %v354 = vld [vmem:[#allocation8] sm:$0xf]
    %v355 = vld [vmem:[#allocation8 + $0x4] sm:$0xf]
    %v356 = vld [vmem:[#allocation8 + $0x8] sm:$0xf]
    %v357 = vld [vmem:[#allocation8 + $0xc] sm:$0xf]
    %v358 = vld [vmem:[#allocation8 + $0x10] sm:$0xf]
    %v359 = vld [vmem:[#allocation8 + $0x14] sm:$0xf]
    %v360 = vld [vmem:[#allocation8 + $0x18] sm:$0xf]
    %v361 = vld [vmem:[#allocation8 + $0x1c] sm:$0xf]
    %v362 = vld [vmem:[#allocation8 + $0x20] sm:$0xf]
    %v363 = vld [vmem:[#allocation8 + $0x24] sm:$0xf]
    %v364 = vld [vmem:[#allocation8 + $0x28] sm:$0xf]
    %v365 = vld [vmem:[#allocation8 + $0x2c] sm:$0xf]
    %v366 = vld [vmem:[#allocation8 + $0x30] sm:$0xf]
    %v367 = vld [vmem:[#allocation8 + $0x34] sm:$0xf]
    %v368 = vld [vmem:[#allocation8 + $0x38] sm:$0xf]
    %v369 = vld [vmem:[#allocation8 + $0x3c] sm:$0xf]
    %v370 = vld [vmem:[%s10] sm:$0x1]
    %v372 = vperm.slane %v370, 0
    %v390 = vunpack.c.l.b16 %v354
    %v391 = vunpack.c.l.b16 %v355
    %v392 = vunpack.c.l.b16 %v356
    %v393 = vunpack.c.l.b16 %v357
    %v394 = vunpack.c.l.b16 %v358
    %v395 = vunpack.c.l.b16 %v359
    %v396 = vunpack.c.l.b16 %v360
    %v397 = vunpack.c.l.b16 %v361
    %v398 = vunpack.c.l.b16 %v362
    %v399 = vunpack.c.l.b16 %v363
    %v400 = vunpack.c.l.b16 %v364
    %v401 = vunpack.c.l.b16 %v365
    %v402 = vunpack.c.l.b16 %v366
    %v403 = vunpack.c.l.b16 %v367
    %v404 = vunpack.c.l.b16 %v368
    %v405 = vunpack.c.l.b16 %v369
    %v406 = vpack.c.b16 %v391, %v390
    %v407 = vpack.c.b16 %v393, %v392
    %v408 = vpack.c.b16 %v395, %v394
    %v409 = vpack.c.b16 %v397, %v396
    %v410 = vpack.c.b16 %v399, %v398
    %v411 = vpack.c.b16 %v401, %v400
    %v412 = vpack.c.b16 %v403, %v402
    %v413 = vpack.c.b16 %v405, %v404
    %422 = vmatpush.bf16.msra.mxu0 %v413
    %423 = vmatpush.bf16.msra.mxu0 %v412
    %424 = vmatpush.bf16.msra.mxu0 %v411
    %425 = vmatpush.bf16.msra.mxu0 %v410
    %426 = vmatpush.bf16.msra.mxu0 %v409
    %427 = vmatpush.bf16.msra.mxu0 %v408
    %428 = vmatpush.bf16.msra.mxu0 %v407
    %429 = vmatpush.bf16.msra.mxu0 %v406
    %430 = vmatmul.bf16.gmra.mxu0 %v353
    %v431 = vpop.f32.mrf.mxu0
    %v432 = vadd.f32 %v372, %v431
    %v433 = vpop.f32.mrf.mxu0
    %434 = vdwg.mxu0
    %v435 = vtanh.pop %v432
    %v436 = vpack.c.bf16 %v435, %v435
    %437 = vst [vmem:[#allocation10] sm:$0xf] %v436
    // Predicated region
    $region62: #{tpu_custom_call.1} parent=1 // pred_check
      _
    $region63: #{tpu_custom_call.1} parent=1 // pred_check_branch
      %439 = sbr.rel (0) target = $region65
    $region64: #{tpu_custom_call.1} parent=1 // pred_region
      %441 = vsyncadd [#allocation4], 0
      %s443 = sshll.u32 [#allocation10], 4
      %s444 = int_to_ptr.vmem [resolvable:$true] %s443
      %s445 = sshll.u32 %s11, 4
      %s446 = int_to_ptr.hbm [resolvable:$true] %s445
      %448 = dma.vmem_to_hbm [thread:$0]  %s444, 64, %s446, [#allocation4]
    $region65: #{tpu_custom_call.1} parent=1 // pred_fallthru
      _
    // Predicated region
    $region66: #{tpu_custom_call.1} parent=1 // pred_check
      _
    $region67: #{tpu_custom_call.1} parent=1 // pred_check_branch
      %450 = sbr.rel (0) target = $region69
    $region68: #{tpu_custom_call.1} parent=1 // pred_region
      %452 = dma.done [#allocation4], 64
    $region69: #{tpu_custom_call.1} parent=1 // pred_fallthru
      _
    %453 = vsyncpa [#allocation3], 1
    %454 = vsyncpa [#allocation6], 1
    %455 = vsyncpa [#allocation9], 1
    %456 = vsyncpa [#allocation4], 1

</llo_original>
